<compile_context>
chip_gen: v5e
topology: v5e:2x2
jax: 0.10.0
libtpu: 0.0.40
codegen_flags: <defaults>
</compile_context>

<pallas_src>
import numpy as np
import jax
import jax.numpy as jnp
from jax.experimental import pallas as pl
from jax.experimental.pallas import tpu as pltpu


def _round_up(x, m):
    return ((x + m - 1) // m) * m


def _loss_kernel(w_ref,        # SMEM (8,)    f32 : loss weights (entries 0..5 used)
                 small_ref,    # VMEM (16,bb) f32 : rows = p1,p2,i1,i2,d1h*3,d2h*3,d1g*3,d2g*3
                 sh_hat_ref,   # VMEM (bb,F)  native dtype
                 sh_gt_ref,    # VMEM (bb,F)  native dtype
                 out_ref):     # SMEM (8,)    f32 : sh_mse,d1_bce,d2_bce,dir1,dir2,sep,total,0
    step = pl.program_id(0)

    @pl.when(step == 0)
    def _init():
        for i in range(8):
            out_ref[i] = jnp.float32(0.0)

    # ---- sh MSE (reduction='sum'), accumulated in f32 ----
    d = sh_hat_ref[...].astype(jnp.float32) - sh_gt_ref[...].astype(jnp.float32)
    sh_mse = jnp.sum(d * d)

    small = small_ref[...]                      # [16, bb] f32
    p1, p2 = small[0:1, :], small[1:2, :]
    i1, i2 = small[2:3, :], small[3:4, :]
    d1h, d2h = small[4:7, :], small[7:10, :]
    d1g, d2g = small[10:13, :], small[13:16, :]

    # ---- BCE (reduction='sum'); log terms clamped at -100 like torch.nn.BCELoss ----
    def bce_sum(p, y):
        logp = jnp.maximum(jnp.log(p), -100.0)
        log1mp = jnp.maximum(jnp.log(1.0 - p), -100.0)
        return jnp.sum(-(y * logp + (1.0 - y) * log1mp))

    d1_bce = bce_sum(p1, i1)
    d2_bce = bce_sum(p2, i2)

    # ---- 3-wide channel dot products as explicit sublane-row FMAs (lane-dense over B) ----
    def dot3(a, b):
        return (a[0:1, :] * b[0:1, :]
                + a[1:2, :] * b[1:2, :]
                + a[2:3, :] * b[2:3, :])

    # dirloss: -sum_b | sum_c (dirhat * ind) * dirgt |  (ind factored out of the sum)
    dir1_cos = -jnp.sum(jnp.abs(dot3(d1h, d1g) * i1))
    dir2_cos = -jnp.sum(jnp.abs(dot3(d2h, d2g) * i2))

    # sepcos: MSE(sum) between |cos_hat| and |cos_gt|, both ind2-gated
    coshat = jnp.abs(dot3(d1h, d2h) * i2)
    cosgt = jnp.abs(dot3(d1g, d2g) * i2)
    sep_cos = jnp.sum((coshat - cosgt) ** 2)

    # ---- accumulate partial sums into the resident SMEM output (scalar path) ----
    out_ref[0] += sh_mse
    out_ref[1] += d1_bce
    out_ref[2] += d2_bce
    out_ref[3] += dir1_cos
    out_ref[4] += dir2_cos
    out_ref[5] += sep_cos

    @pl.when(step == pl.num_programs(0) - 1)
    def _finalize():
        out_ref[6] = (w_ref[0] * out_ref[0] + w_ref[1] * out_ref[1]
                      + w_ref[2] * out_ref[2] + w_ref[3] * out_ref[3]
                      + w_ref[4] * out_ref[4] + w_ref[5] * out_ref[5])


def patch_weighted_sep_loss(out, sh_gt, dir_gt, ind_gt, weight, *, block_b=512):
    """JAX/Pallas equivalent of PatchWeightedSepLoss.forward."""
    sh_hat, p1_hat, p2_hat, dir1_hat, dir2_hat = out
    B = sh_hat.shape[0]
    f32 = jnp.float32

    # unpack_gt (centre voxel of the 3x3x3 patch, matches PyTorch indexing exactly)
    ind1_gt = ind_gt[:, 0:1, 1:2, 1:2, 1:2]
    ind2_gt = ind_gt[:, 1:2, 1:2, 1:2, 1:2]
    dir1_gt = dir_gt[:, 0:3, 1:2, 1:2, 1:2]
    dir2_gt = dir_gt[:, 3:6, 1:2, 1:2, 1:2]

    # big slabs stay in the model's native dtype (cast to f32 inside the kernel)
    sh_hat2 = sh_hat.reshape(B, -1)
    sh_gt2 = sh_gt.reshape(B, -1)
    Fsh = sh_hat2.shape[1]

    # one tiny [16, B] slab (features on sublanes, batch on lanes) for everything else
    small = jnp.concatenate([
        p1_hat.reshape(B, 1), p2_hat.reshape(B, 1),
        ind1_gt.reshape(B, 1), ind2_gt.reshape(B, 1),
        dir1_hat.reshape(B, 3), dir2_hat.reshape(B, 3),
        dir1_gt.reshape(B, 3), dir2_gt.reshape(B, 3),
    ], axis=1).astype(f32).T                              # [16, B]

    # batch tiling; padded rows are all-zero and contribute exactly 0 to every sum
    if B <= block_b:
        bb = _round_up(B, 8)
    else:
        bb = _round_up(block_b, 128)
    Bp = _round_up(B, bb)
    if Bp != B:
        sh_hat2 = jnp.pad(sh_hat2, ((0, Bp - B), (0, 0)))
        sh_gt2 = jnp.pad(sh_gt2, ((0, Bp - B), (0, 0)))
        small = jnp.pad(small, ((0, 0), (0, Bp - B)))
    nsteps = Bp // bb

    w_vec = jnp.zeros((8,), f32).at[:6].set(jnp.asarray(weight, f32))

    sh_bytes = jnp.dtype(sh_hat2.dtype).itemsize
    need = 2 * (2 * bb * Fsh * sh_bytes + 16 * bb * 4)    # double-buffered blocks
    vmem_limit = int(min(64 * 1024 * 1024, max(16 * 1024 * 1024, need + (2 << 20))))

    smem = pltpu.MemorySpace.SMEM
    out_vec = pl.pallas_call(
        _loss_kernel,
        out_shape=jax.ShapeDtypeStruct((8,), f32),
        grid=(nsteps,),
        in_specs=[
            pl.BlockSpec(memory_space=smem),                  # weights (whole, SMEM)
            pl.BlockSpec((16, bb), lambda i: (0, i)),         # small slab, tiled on lanes
            pl.BlockSpec((bb, Fsh), lambda i: (i, 0)),        # sh_hat, tiled on batch
            pl.BlockSpec((bb, Fsh), lambda i: (i, 0)),        # sh_gt,  tiled on batch
        ],
        out_specs=pl.BlockSpec(memory_space=smem),            # (8,) scalar results in SMEM
        compiler_params=pltpu.CompilerParams(
            dimension_semantics=("arbitrary",),               # batch axis is a reduction
            vmem_limit_bytes=vmem_limit),
    )(w_vec, small, sh_hat2, sh_gt2)

    loss_dict = {
        "total": out_vec[6],
        "sh_mse": out_vec[0],
        "dir1_bce": out_vec[1],
        "dir2_bce": out_vec[2],
        "dir1_cos": out_vec[3],
        "dir2_cos": out_vec[4],
        "sep_cos": out_vec[5],
    }
    return loss_dict, out_vec[6]


def _reference(out, sh_gt, dir_gt, ind_gt, weight):
    """Pure-JAX reference mirroring the PyTorch module (for correctness check)."""
    sh_hat, p1_hat, p2_hat, dir1_hat, dir2_hat = out
    ind1 = ind_gt[:, 0:1, 1:2, 1:2, 1:2]
    ind2 = ind_gt[:, 1:2, 1:2, 1:2, 1:2]
    d1g = dir_gt[:, 0:3, 1:2, 1:2, 1:2]
    d2g = dir_gt[:, 3:6, 1:2, 1:2, 1:2]

    sh_mse = jnp.sum((sh_hat - sh_gt) ** 2)

    def bce(p, y):
        return jnp.sum(-(y * jnp.maximum(jnp.log(p), -100.0)
                         + (1.0 - y) * jnp.maximum(jnp.log(1.0 - p), -100.0)))

    d1_bce = bce(p1_hat, ind1)
    d2_bce = bce(p2_hat, ind2)
    dir1_cos = -jnp.sum(jnp.abs(jnp.sum((dir1_hat * ind1) * d1g, axis=1)))
    dir2_cos = -jnp.sum(jnp.abs(jnp.sum((dir2_hat * ind2) * d2g, axis=1)))
    coshat = jnp.abs(jnp.sum(dir1_hat * (dir2_hat * ind2), axis=1))
    cosgt = jnp.abs(jnp.sum(d1g * (d2g * ind2), axis=1))
    sep = jnp.sum((coshat - cosgt) ** 2)
    w = jnp.asarray(weight, jnp.float32)
    total = (w[0] * sh_mse + w[1] * d1_bce + w[2] * d2_bce
             + w[3] * dir1_cos + w[4] * dir2_cos + w[5] * sep)
    return total, (sh_mse, d1_bce, d2_bce, dir1_cos, dir2_cos, sep)


if __name__ == "__main__":
    key = jax.random.PRNGKey(0)
    ks = jax.random.split(key, 8)
    B, C_SH = 2, 8

    # ground-truth patches (NCDHW, 3x3x3 spatial patch)
    sh_gt = jax.random.normal(ks[0], (B, C_SH, 3, 3, 3), jnp.float32)
    dir_gt = jax.random.normal(ks[1], (B, 6, 3, 3, 3), jnp.float32)
    ind_gt = jax.random.bernoulli(ks[2], 0.7, (B, 2, 3, 3, 3)).astype(jnp.float32)

    # model predictions
    sh_hat = jax.random.normal(ks[3], (B, C_SH, 3, 3, 3), jnp.float32)
    p1_hat = jax.nn.sigmoid(jax.random.normal(ks[4], (B, 1, 1, 1, 1), jnp.float32))
    p2_hat = jax.nn.sigmoid(jax.random.normal(ks[5], (B, 1, 1, 1, 1), jnp.float32))
    dir1_hat = jax.random.normal(ks[6], (B, 3, 1, 1, 1), jnp.float32)
    dir2_hat = jax.random.normal(ks[7], (B, 3, 1, 1, 1), jnp.float32)

    weight = np.ones(6)  # PatchWeightedSepLoss default module parameter

    out = (sh_hat, p1_hat, p2_hat, dir1_hat, dir2_hat)
    loss_dict, loss = patch_weighted_sep_loss(out, sh_gt, dir_gt, ind_gt, weight)
    loss = jax.block_until_ready(loss)

    # check against pure-JAX reference
    ref_total, ref_parts = _reference(out, sh_gt, dir_gt, ind_gt, weight)
    got = np.array([loss_dict["sh_mse"], loss_dict["dir1_bce"], loss_dict["dir2_bce"],
                    loss_dict["dir1_cos"], loss_dict["dir2_cos"], loss_dict["sep_cos"],
                    loss_dict["total"]])
    exp = np.array([float(v) for v in ref_parts] + [float(ref_total)])
    assert np.allclose(got, exp, rtol=1e-5, atol=1e-5), (got, exp)

    print("KERNEL_OK")
</pallas_src>

<mosaic_0001>
module attributes {stable_mosaic.version = 11 : i64} {
  func.func @_loss_kernel(%arg0: i32, %arg1: memref<8xf32, #tpu.memory_space<smem>>, %arg2: memref<16x8xf32, #tpu.memory_space<vmem>>, %arg3: memref<8x216xf32, #tpu.memory_space<vmem>>, %arg4: memref<8x216xf32, #tpu.memory_space<vmem>>, %arg5: memref<8xf32, #tpu.memory_space<smem>>) attributes {dimension_semantics = [#tpu.dimension_semantics<arbitrary>], iteration_bounds = array<i64: 1>, scalar_prefetch = 0 : i64, scratch_operands = 0 : i64, tpu.core_type = #tpu.core_type<tc>, window_params = [{transform_indices = @transform_0, window_bounds = array<i64: 8>}, {transform_indices = @transform_1, window_bounds = array<i64: 16, 8>}, {transform_indices = @transform_2, window_bounds = array<i64: 8, 216>}, {transform_indices = @transform_3, window_bounds = array<i64: 8, 216>}, {transform_indices = @transform_4, window_bounds = array<i64: 8>}]} {
    %c0_i32 = arith.constant 0 : i32
    %0 = arith.cmpi eq, %arg0, %c0_i32 : i32
    %1 = arith.extui %0 : i1 to i32
    %c0_i32_0 = arith.constant 0 : i32
    %2 = arith.cmpi ne, %1, %c0_i32_0 : i32
    scf.if %2 {
      %cst_32 = arith.constant 0.000000e+00 : f32
      %c0_33 = arith.constant 0 : index
      %147 = memref.load %arg5[%c0_33] : memref<8xf32, #tpu.memory_space<smem>>
      memref.store %cst_32, %arg5[%c0_33] : memref<8xf32, #tpu.memory_space<smem>>
      %cst_34 = arith.constant 0.000000e+00 : f32
      %c1_35 = arith.constant 1 : index
      %148 = memref.load %arg5[%c1_35] : memref<8xf32, #tpu.memory_space<smem>>
      memref.store %cst_34, %arg5[%c1_35] : memref<8xf32, #tpu.memory_space<smem>>
      %cst_36 = arith.constant 0.000000e+00 : f32
      %c2_37 = arith.constant 2 : index
      %149 = memref.load %arg5[%c2_37] : memref<8xf32, #tpu.memory_space<smem>>
      memref.store %cst_36, %arg5[%c2_37] : memref<8xf32, #tpu.memory_space<smem>>
      %cst_38 = arith.constant 0.000000e+00 : f32
      %c3_39 = arith.constant 3 : index
      %150 = memref.load %arg5[%c3_39] : memref<8xf32, #tpu.memory_space<smem>>
      memref.store %cst_38, %arg5[%c3_39] : memref<8xf32, #tpu.memory_space<smem>>
      %cst_40 = arith.constant 0.000000e+00 : f32
      %c4_41 = arith.constant 4 : index
      %151 = memref.load %arg5[%c4_41] : memref<8xf32, #tpu.memory_space<smem>>
      memref.store %cst_40, %arg5[%c4_41] : memref<8xf32, #tpu.memory_space<smem>>
      %cst_42 = arith.constant 0.000000e+00 : f32
      %c5_43 = arith.constant 5 : index
      %152 = memref.load %arg5[%c5_43] : memref<8xf32, #tpu.memory_space<smem>>
      memref.store %cst_42, %arg5[%c5_43] : memref<8xf32, #tpu.memory_space<smem>>
      %cst_44 = arith.constant 0.000000e+00 : f32
      %c6 = arith.constant 6 : index
      %153 = memref.load %arg5[%c6] : memref<8xf32, #tpu.memory_space<smem>>
      memref.store %cst_44, %arg5[%c6] : memref<8xf32, #tpu.memory_space<smem>>
      %cst_45 = arith.constant 0.000000e+00 : f32
      %c7 = arith.constant 7 : index
      %154 = memref.load %arg5[%c7] : memref<8xf32, #tpu.memory_space<smem>>
      memref.store %cst_45, %arg5[%c7] : memref<8xf32, #tpu.memory_space<smem>>
    } else {
    }
    %c0 = arith.constant 0 : index
    %c0_1 = arith.constant 0 : index
    %3 = vector.load %arg3[%c0, %c0_1] : memref<8x216xf32, #tpu.memory_space<vmem>>, vector<8x216xf32>
    %c0_2 = arith.constant 0 : index
    %c0_3 = arith.constant 0 : index
    %4 = vector.load %arg4[%c0_2, %c0_3] : memref<8x216xf32, #tpu.memory_space<vmem>>, vector<8x216xf32>
    %5 = arith.subf %3, %4 : vector<8x216xf32>
    %6 = arith.mulf %5, %5 : vector<8x216xf32>
    %7 = vector.shape_cast %6 : vector<8x216xf32> to vector<1x8x216xf32>
    %cst = arith.constant dense<0.000000e+00> : vector<1xf32>
    %8 = vector.multi_reduction <add>, %7, %cst [1, 2] : vector<1x8x216xf32> to vector<1xf32>
    %9 = vector.shape_cast %8 : vector<1xf32> to vector<1x1x1xf32>
    %10 = vector.extract %9[0, 0, 0] : f32 from vector<1x1x1xf32>
    %c0_4 = arith.constant 0 : index
    %c0_5 = arith.constant 0 : index
    %11 = vector.load %arg2[%c0_4, %c0_5] : memref<16x8xf32, #tpu.memory_space<vmem>>, vector<16x8xf32>
    %12 = vector.extract_strided_slice %11 {offsets = [0, 0], sizes = [1, 8], strides = [1, 1]} : vector<16x8xf32> to vector<1x8xf32>
    %13 = vector.extract_strided_slice %11 {offsets = [1, 0], sizes = [1, 8], strides = [1, 1]} : vector<16x8xf32> to vector<1x8xf32>
    %14 = vector.extract_strided_slice %11 {offsets = [2, 0], sizes = [1, 8], strides = [1, 1]} : vector<16x8xf32> to vector<1x8xf32>
    %15 = vector.extract_strided_slice %11 {offsets = [3, 0], sizes = [1, 8], strides = [1, 1]} : vector<16x8xf32> to vector<1x8xf32>
    %16 = vector.extract_strided_slice %11 {offsets = [4, 0], sizes = [3, 8], strides = [1, 1]} : vector<16x8xf32> to vector<3x8xf32>
    %17 = vector.extract_strided_slice %11 {offsets = [7, 0], sizes = [3, 8], strides = [1, 1]} : vector<16x8xf32> to vector<3x8xf32>
    %18 = vector.extract_strided_slice %11 {offsets = [10, 0], sizes = [3, 8], strides = [1, 1]} : vector<16x8xf32> to vector<3x8xf32>
    %19 = vector.extract_strided_slice %11 {offsets = [13, 0], sizes = [3, 8], strides = [1, 1]} : vector<16x8xf32> to vector<3x8xf32>
    %20 = math.log %12 : vector<1x8xf32>
    %cst_6 = arith.constant -1.000000e+02 : f32
    %21 = vector.broadcast %cst_6 : f32 to vector<1x8xf32>
    %22 = arith.maximumf %20, %21 : vector<1x8xf32>
    %cst_7 = arith.constant 1.000000e+00 : f32
    %23 = vector.broadcast %cst_7 : f32 to vector<1x8xf32>
    %24 = arith.subf %23, %12 : vector<1x8xf32>
    %25 = math.log %24 : vector<1x8xf32>
    %cst_8 = arith.constant -1.000000e+02 : f32
    %26 = vector.broadcast %cst_8 : f32 to vector<1x8xf32>
    %27 = arith.maximumf %25, %26 : vector<1x8xf32>
    %28 = arith.mulf %14, %22 : vector<1x8xf32>
    %cst_9 = arith.constant 1.000000e+00 : f32
    %29 = vector.broadcast %cst_9 : f32 to vector<1x8xf32>
    %30 = arith.subf %29, %14 : vector<1x8xf32>
    %31 = arith.mulf %30, %27 : vector<1x8xf32>
    %32 = arith.addf %28, %31 : vector<1x8xf32>
    %cst_10 = arith.constant 0.000000e+00 : f32
    %33 = vector.broadcast %cst_10 : f32 to vector<1x8xf32>
    %34 = arith.subf %33, %32 : vector<1x8xf32>
    %35 = vector.shape_cast %34 : vector<1x8xf32> to vector<1x1x8xf32>
    %cst_11 = arith.constant dense<0.000000e+00> : vector<1xf32>
    %36 = vector.multi_reduction <add>, %35, %cst_11 [1, 2] : vector<1x1x8xf32> to vector<1xf32>
    %37 = vector.shape_cast %36 : vector<1xf32> to vector<1x1x1xf32>
    %38 = vector.extract %37[0, 0, 0] : f32 from vector<1x1x1xf32>
    %39 = math.log %13 : vector<1x8xf32>
    %cst_12 = arith.constant -1.000000e+02 : f32
    %40 = vector.broadcast %cst_12 : f32 to vector<1x8xf32>
    %41 = arith.maximumf %39, %40 : vector<1x8xf32>
    %cst_13 = arith.constant 1.000000e+00 : f32
    %42 = vector.broadcast %cst_13 : f32 to vector<1x8xf32>
    %43 = arith.subf %42, %13 : vector<1x8xf32>
    %44 = math.log %43 : vector<1x8xf32>
    %cst_14 = arith.constant -1.000000e+02 : f32
    %45 = vector.broadcast %cst_14 : f32 to vector<1x8xf32>
    %46 = arith.maximumf %44, %45 : vector<1x8xf32>
    %47 = arith.mulf %15, %41 : vector<1x8xf32>
    %cst_15 = arith.constant 1.000000e+00 : f32
    %48 = vector.broadcast %cst_15 : f32 to vector<1x8xf32>
    %49 = arith.subf %48, %15 : vector<1x8xf32>
    %50 = arith.mulf %49, %46 : vector<1x8xf32>
    %51 = arith.addf %47, %50 : vector<1x8xf32>
    %cst_16 = arith.constant 0.000000e+00 : f32
    %52 = vector.broadcast %cst_16 : f32 to vector<1x8xf32>
    %53 = arith.subf %52, %51 : vector<1x8xf32>
    %54 = vector.shape_cast %53 : vector<1x8xf32> to vector<1x1x8xf32>
    %cst_17 = arith.constant dense<0.000000e+00> : vector<1xf32>
    %55 = vector.multi_reduction <add>, %54, %cst_17 [1, 2] : vector<1x1x8xf32> to vector<1xf32>
    %56 = vector.shape_cast %55 : vector<1xf32> to vector<1x1x1xf32>
    %57 = vector.extract %56[0, 0, 0] : f32 from vector<1x1x1xf32>
    %58 = vector.extract_strided_slice %16 {offsets = [0, 0], sizes = [1, 8], strides = [1, 1]} : vector<3x8xf32> to vector<1x8xf32>
    %59 = vector.extract_strided_slice %18 {offsets = [0, 0], sizes = [1, 8], strides = [1, 1]} : vector<3x8xf32> to vector<1x8xf32>
    %60 = arith.mulf %58, %59 : vector<1x8xf32>
    %61 = vector.extract_strided_slice %16 {offsets = [1, 0], sizes = [1, 8], strides = [1, 1]} : vector<3x8xf32> to vector<1x8xf32>
    %62 = vector.extract_strided_slice %18 {offsets = [1, 0], sizes = [1, 8], strides = [1, 1]} : vector<3x8xf32> to vector<1x8xf32>
    %63 = arith.mulf %61, %62 : vector<1x8xf32>
    %64 = arith.addf %60, %63 : vector<1x8xf32>
    %65 = vector.extract_strided_slice %16 {offsets = [2, 0], sizes = [1, 8], strides = [1, 1]} : vector<3x8xf32> to vector<1x8xf32>
    %66 = vector.extract_strided_slice %18 {offsets = [2, 0], sizes = [1, 8], strides = [1, 1]} : vector<3x8xf32> to vector<1x8xf32>
    %67 = arith.mulf %65, %66 : vector<1x8xf32>
    %68 = arith.addf %64, %67 : vector<1x8xf32>
    %69 = arith.mulf %68, %14 : vector<1x8xf32>
    %70 = math.absf %69 : vector<1x8xf32>
    %71 = vector.shape_cast %70 : vector<1x8xf32> to vector<1x1x8xf32>
    %cst_18 = arith.constant dense<0.000000e+00> : vector<1xf32>
    %72 = vector.multi_reduction <add>, %71, %cst_18 [1, 2] : vector<1x1x8xf32> to vector<1xf32>
    %73 = vector.shape_cast %72 : vector<1xf32> to vector<1x1x1xf32>
    %74 = vector.extract %73[0, 0, 0] : f32 from vector<1x1x1xf32>
    %cst_19 = arith.constant 0.000000e+00 : f32
    %75 = arith.subf %cst_19, %74 : f32
    %76 = vector.extract_strided_slice %17 {offsets = [0, 0], sizes = [1, 8], strides = [1, 1]} : vector<3x8xf32> to vector<1x8xf32>
    %77 = vector.extract_strided_slice %19 {offsets = [0, 0], sizes = [1, 8], strides = [1, 1]} : vector<3x8xf32> to vector<1x8xf32>
    %78 = arith.mulf %76, %77 : vector<1x8xf32>
    %79 = vector.extract_strided_slice %17 {offsets = [1, 0], sizes = [1, 8], strides = [1, 1]} : vector<3x8xf32> to vector<1x8xf32>
    %80 = vector.extract_strided_slice %19 {offsets = [1, 0], sizes = [1, 8], strides = [1, 1]} : vector<3x8xf32> to vector<1x8xf32>
    %81 = arith.mulf %79, %80 : vector<1x8xf32>
    %82 = arith.addf %78, %81 : vector<1x8xf32>
    %83 = vector.extract_strided_slice %17 {offsets = [2, 0], sizes = [1, 8], strides = [1, 1]} : vector<3x8xf32> to vector<1x8xf32>
    %84 = vector.extract_strided_slice %19 {offsets = [2, 0], sizes = [1, 8], strides = [1, 1]} : vector<3x8xf32> to vector<1x8xf32>
    %85 = arith.mulf %83, %84 : vector<1x8xf32>
    %86 = arith.addf %82, %85 : vector<1x8xf32>
    %87 = arith.mulf %86, %15 : vector<1x8xf32>
    %88 = math.absf %87 : vector<1x8xf32>
    %89 = vector.shape_cast %88 : vector<1x8xf32> to vector<1x1x8xf32>
    %cst_20 = arith.constant dense<0.000000e+00> : vector<1xf32>
    %90 = vector.multi_reduction <add>, %89, %cst_20 [1, 2] : vector<1x1x8xf32> to vector<1xf32>
    %91 = vector.shape_cast %90 : vector<1xf32> to vector<1x1x1xf32>
    %92 = vector.extract %91[0, 0, 0] : f32 from vector<1x1x1xf32>
    %cst_21 = arith.constant 0.000000e+00 : f32
    %93 = arith.subf %cst_21, %92 : f32
    %94 = vector.extract_strided_slice %16 {offsets = [0, 0], sizes = [1, 8], strides = [1, 1]} : vector<3x8xf32> to vector<1x8xf32>
    %95 = vector.extract_strided_slice %17 {offsets = [0, 0], sizes = [1, 8], strides = [1, 1]} : vector<3x8xf32> to vector<1x8xf32>
    %96 = arith.mulf %94, %95 : vector<1x8xf32>
    %97 = vector.extract_strided_slice %16 {offsets = [1, 0], sizes = [1, 8], strides = [1, 1]} : vector<3x8xf32> to vector<1x8xf32>
    %98 = vector.extract_strided_slice %17 {offsets = [1, 0], sizes = [1, 8], strides = [1, 1]} : vector<3x8xf32> to vector<1x8xf32>
    %99 = arith.mulf %97, %98 : vector<1x8xf32>
    %100 = arith.addf %96, %99 : vector<1x8xf32>
    %101 = vector.extract_strided_slice %16 {offsets = [2, 0], sizes = [1, 8], strides = [1, 1]} : vector<3x8xf32> to vector<1x8xf32>
    %102 = vector.extract_strided_slice %17 {offsets = [2, 0], sizes = [1, 8], strides = [1, 1]} : vector<3x8xf32> to vector<1x8xf32>
    %103 = arith.mulf %101, %102 : vector<1x8xf32>
    %104 = arith.addf %100, %103 : vector<1x8xf32>
    %105 = arith.mulf %104, %15 : vector<1x8xf32>
    %106 = math.absf %105 : vector<1x8xf32>
    %107 = vector.extract_strided_slice %18 {offsets = [0, 0], sizes = [1, 8], strides = [1, 1]} : vector<3x8xf32> to vector<1x8xf32>
    %108 = vector.extract_strided_slice %19 {offsets = [0, 0], sizes = [1, 8], strides = [1, 1]} : vector<3x8xf32> to vector<1x8xf32>
    %109 = arith.mulf %107, %108 : vector<1x8xf32>
    %110 = vector.extract_strided_slice %18 {offsets = [1, 0], sizes = [1, 8], strides = [1, 1]} : vector<3x8xf32> to vector<1x8xf32>
    %111 = vector.extract_strided_slice %19 {offsets = [1, 0], sizes = [1, 8], strides = [1, 1]} : vector<3x8xf32> to vector<1x8xf32>
    %112 = arith.mulf %110, %111 : vector<1x8xf32>
    %113 = arith.addf %109, %112 : vector<1x8xf32>
    %114 = vector.extract_strided_slice %18 {offsets = [2, 0], sizes = [1, 8], strides = [1, 1]} : vector<3x8xf32> to vector<1x8xf32>
    %115 = vector.extract_strided_slice %19 {offsets = [2, 0], sizes = [1, 8], strides = [1, 1]} : vector<3x8xf32> to vector<1x8xf32>
    %116 = arith.mulf %114, %115 : vector<1x8xf32>
    %117 = arith.addf %113, %116 : vector<1x8xf32>
    %118 = arith.mulf %117, %15 : vector<1x8xf32>
    %119 = math.absf %118 : vector<1x8xf32>
    %120 = arith.subf %106, %119 : vector<1x8xf32>
    %121 = arith.mulf %120, %120 : vector<1x8xf32>
    %122 = vector.shape_cast %121 : vector<1x8xf32> to vector<1x1x8xf32>
    %cst_22 = arith.constant dense<0.000000e+00> : vector<1xf32>
    %123 = vector.multi_reduction <add>, %122, %cst_22 [1, 2] : vector<1x1x8xf32> to vector<1xf32>
    %124 = vector.shape_cast %123 : vector<1xf32> to vector<1x1x1xf32>
    %125 = vector.extract %124[0, 0, 0] : f32 from vector<1x1x1xf32>
    %c0_23 = arith.constant 0 : index
    %126 = memref.load %arg5[%c0_23] : memref<8xf32, #tpu.memory_space<smem>>
    %127 = arith.addf %126, %10 : f32
    %c0_24 = arith.constant 0 : index
    %128 = memref.load %arg5[%c0_24] : memref<8xf32, #tpu.memory_space<smem>>
    memref.store %127, %arg5[%c0_24] : memref<8xf32, #tpu.memory_space<smem>>
    %c1 = arith.constant 1 : index
    %129 = memref.load %arg5[%c1] : memref<8xf32, #tpu.memory_space<smem>>
    %130 = arith.addf %129, %38 : f32
    %c1_25 = arith.constant 1 : index
    %131 = memref.load %arg5[%c1_25] : memref<8xf32, #tpu.memory_space<smem>>
    memref.store %130, %arg5[%c1_25] : memref<8xf32, #tpu.memory_space<smem>>
    %c2 = arith.constant 2 : index
    %132 = memref.load %arg5[%c2] : memref<8xf32, #tpu.memory_space<smem>>
    %133 = arith.addf %132, %57 : f32
    %c2_26 = arith.constant 2 : index
    %134 = memref.load %arg5[%c2_26] : memref<8xf32, #tpu.memory_space<smem>>
    memref.store %133, %arg5[%c2_26] : memref<8xf32, #tpu.memory_space<smem>>
    %c3 = arith.constant 3 : index
    %135 = memref.load %arg5[%c3] : memref<8xf32, #tpu.memory_space<smem>>
    %136 = arith.addf %135, %75 : f32
    %c3_27 = arith.constant 3 : index
    %137 = memref.load %arg5[%c3_27] : memref<8xf32, #tpu.memory_space<smem>>
    memref.store %136, %arg5[%c3_27] : memref<8xf32, #tpu.memory_space<smem>>
    %c4 = arith.constant 4 : index
    %138 = memref.load %arg5[%c4] : memref<8xf32, #tpu.memory_space<smem>>
    %139 = arith.addf %138, %93 : f32
    %c4_28 = arith.constant 4 : index
    %140 = memref.load %arg5[%c4_28] : memref<8xf32, #tpu.memory_space<smem>>
    memref.store %139, %arg5[%c4_28] : memref<8xf32, #tpu.memory_space<smem>>
    %c5 = arith.constant 5 : index
    %141 = memref.load %arg5[%c5] : memref<8xf32, #tpu.memory_space<smem>>
    %142 = arith.addf %141, %125 : f32
    %c5_29 = arith.constant 5 : index
    %143 = memref.load %arg5[%c5_29] : memref<8xf32, #tpu.memory_space<smem>>
    memref.store %142, %arg5[%c5_29] : memref<8xf32, #tpu.memory_space<smem>>
    %c0_i32_30 = arith.constant 0 : i32
    %144 = arith.cmpi eq, %arg0, %c0_i32_30 : i32
    %145 = arith.extui %144 : i1 to i32
    %c0_i32_31 = arith.constant 0 : i32
    %146 = arith.cmpi ne, %145, %c0_i32_31 : i32
    scf.if %146 {
      %c0_32 = arith.constant 0 : index
      %147 = memref.load %arg1[%c0_32] : memref<8xf32, #tpu.memory_space<smem>>
      %c0_33 = arith.constant 0 : index
      %148 = memref.load %arg5[%c0_33] : memref<8xf32, #tpu.memory_space<smem>>
      %149 = arith.mulf %147, %148 : f32
      %c1_34 = arith.constant 1 : index
      %150 = memref.load %arg1[%c1_34] : memref<8xf32, #tpu.memory_space<smem>>
      %c1_35 = arith.constant 1 : index
      %151 = memref.load %arg5[%c1_35] : memref<8xf32, #tpu.memory_space<smem>>
      %152 = arith.mulf %150, %151 : f32
      %153 = arith.addf %149, %152 : f32
      %c2_36 = arith.constant 2 : index
      %154 = memref.load %arg1[%c2_36] : memref<8xf32, #tpu.memory_space<smem>>
      %c2_37 = arith.constant 2 : index
      %155 = memref.load %arg5[%c2_37] : memref<8xf32, #tpu.memory_space<smem>>
      %156 = arith.mulf %154, %155 : f32
      %157 = arith.addf %153, %156 : f32
      %c3_38 = arith.constant 3 : index
      %158 = memref.load %arg1[%c3_38] : memref<8xf32, #tpu.memory_space<smem>>
      %c3_39 = arith.constant 3 : index
      %159 = memref.load %arg5[%c3_39] : memref<8xf32, #tpu.memory_space<smem>>
      %160 = arith.mulf %158, %159 : f32
      %161 = arith.addf %157, %160 : f32
      %c4_40 = arith.constant 4 : index
      %162 = memref.load %arg1[%c4_40] : memref<8xf32, #tpu.memory_space<smem>>
      %c4_41 = arith.constant 4 : index
      %163 = memref.load %arg5[%c4_41] : memref<8xf32, #tpu.memory_space<smem>>
      %164 = arith.mulf %162, %163 : f32
      %165 = arith.addf %161, %164 : f32
      %c5_42 = arith.constant 5 : index
      %166 = memref.load %arg1[%c5_42] : memref<8xf32, #tpu.memory_space<smem>>
      %c5_43 = arith.constant 5 : index
      %167 = memref.load %arg5[%c5_43] : memref<8xf32, #tpu.memory_space<smem>>
      %168 = arith.mulf %166, %167 : f32
      %169 = arith.addf %165, %168 : f32
      %c6 = arith.constant 6 : index
      %170 = memref.load %arg5[%c6] : memref<8xf32, #tpu.memory_space<smem>>
      memref.store %169, %arg5[%c6] : memref<8xf32, #tpu.memory_space<smem>>
    } else {
    }
    return
  }
  func.func @transform_0(%arg0: i32) -> i32 {
    %c0_i32 = arith.constant 0 : i32
    %c0_i32_0 = arith.constant 0 : i32
    return %c0_i32 : i32
  }
  func.func @transform_1(%arg0: i32) -> (i32, i32) {
    %c0_i32 = arith.constant 0 : i32
    %c0_i32_0 = arith.constant 0 : i32
    return %c0_i32, %arg0 : i32, i32
  }
  func.func @transform_2(%arg0: i32) -> (i32, i32) {
    %c0_i32 = arith.constant 0 : i32
    %c0_i32_0 = arith.constant 0 : i32
    return %arg0, %c0_i32 : i32, i32
  }
  func.func @transform_3(%arg0: i32) -> (i32, i32) {
    %c0_i32 = arith.constant 0 : i32
    %c0_i32_0 = arith.constant 0 : i32
    return %arg0, %c0_i32 : i32, i32
  }
  func.func @transform_4(%arg0: i32) -> i32 {
    %c0_i32 = arith.constant 0 : i32
    %c0_i32_0 = arith.constant 0 : i32
    return %c0_i32 : i32
  }
}

</mosaic_0001>

<llo_original>
// kernel: tpu_custom_call.1
$region0: #{tpu_custom_call.1}
  #allocation0 [shape = 'u32[]', space=smem, size = 0x4, offset = 0x4, fixed_abs, tag = 'smem constant byte address 0x4 - core index']
  #allocation1 [shape = 'u32[72,128]{1,0:T(1,128)}', space=vmem, size = 0x9000, scoped, tag = 'internal scratch']
  %s0 = inlined_call_operand.vmem [shape: f32[8], index: 0, kind: input, shape index: {}]
  %s1 = inlined_call_operand.vmem [shape: f32[16,8], index: 1, kind: input, shape index: {}]
  %s2 = inlined_call_operand.vmem [shape: f32[8,216], index: 2, kind: input, shape index: {}]
  %s3 = inlined_call_operand.hbm [shape: f32[8,216], index: 3, kind: input, shape index: {}]
  %s4 = inlined_call_operand.hbm [shape: f32[8], index: 4, kind: output, shape index: {}]
  %s5 = sld [smem:[#allocation0]]
  $region42: #{tpu_custom_call.1} parent=0
    _
  %s7 = ssub.s32 1, %s5
  %s8 = scalar_select 0, %s7, %s5
  $region1: #{tpu_custom_call.1} parent=0
    #allocation2 [shape = 'u8[512]{0}', space=smem, size = 0x200, scoped, tag = 'input window, operand 0, single buffered']
    #allocation3 [shape = 's32[1]{0}', space=sflag, size = 0x4, scoped, tag = 'scoped memory for tpu_custom_call.1']
    #allocation4 [shape = 's32[1]{0}', space=sflag, size = 0x4, scoped, tag = 'scoped memory for tpu_custom_call.1']
    #allocation5 [shape = 's32[1]{0}', space=sflag, size = 0x4, scoped, tag = 'scoped memory for tpu_custom_call.1']
    #allocation6 [shape = 'u8[8192]{0}', space=vmem, size = 0x2000, scoped, tag = 'input window, operand 3, single buffered']
    #allocation7 [shape = 'u8[512]{0}', space=smem, size = 0x200, scoped, tag = 'output window, operand 0, single buffered']
    %9 = vsyncpa [#allocation5], 0
    %10 = vsyncpa [#allocation3], 0
    %11 = vsyncpa [#allocation4], 0
    // Predicated region
    $region2: #{tpu_custom_call.1} parent=1 // pred_check
      _
    $region3: #{tpu_custom_call.1} parent=1 // pred_check_branch
      %13 = sbr.rel (0) target = $region5
    $region4: #{tpu_custom_call.1} parent=1 // pred_region
      %15 = vsyncadd [#allocation5], 0
      %s17 = sshll.u32 %s0, 4
      %s18 = int_to_ptr.vmem [resolvable:$true] %s17
      %20 = dma.vmem_to_smem %s18, 16, [#allocation2], [#allocation5]
    $region5: #{tpu_custom_call.1} parent=1 // pred_fallthru
      _
    // Predicated region
    $region6: #{tpu_custom_call.1} parent=1 // pred_check
      _
    $region7: #{tpu_custom_call.1} parent=1 // pred_check_branch
      %22 = sbr.rel (0) target = $region9
    $region8: #{tpu_custom_call.1} parent=1 // pred_region
      _
    $region9: #{tpu_custom_call.1} parent=1 // pred_fallthru
      _
    // Predicated region
    $region10: #{tpu_custom_call.1} parent=1 // pred_check
      _
    $region11: #{tpu_custom_call.1} parent=1 // pred_check_branch
      %24 = sbr.rel (0) target = $region13
    $region12: #{tpu_custom_call.1} parent=1 // pred_region
      _
    $region13: #{tpu_custom_call.1} parent=1 // pred_fallthru
      _
    // Predicated region
    $region14: #{tpu_custom_call.1} parent=1 // pred_check
      _
    $region15: #{tpu_custom_call.1} parent=1 // pred_check_branch
      %26 = sbr.rel (0) target = $region17
    $region16: #{tpu_custom_call.1} parent=1 // pred_region
      %28 = vsyncadd [#allocation3], 0
      %s30 = sshll.u32 %s3, 4
      %s31 = int_to_ptr.hbm [resolvable:$true] %s30
      %s32 = sshll.u32 [#allocation6], 4
      %s33 = int_to_ptr.vmem [resolvable:$true] %s32
      %35 = dma.hbm_to_vmem [thread:$0]  %s31, 256, %s33, [#allocation3]
    $region17: #{tpu_custom_call.1} parent=1 // pred_fallthru
      _
    // Predicated region
    $region18: #{tpu_custom_call.1} parent=1 // pred_check
      _
    $region19: #{tpu_custom_call.1} parent=1 // pred_check_branch
      %37 = sbr.rel (0) target = $region21
    $region20: #{tpu_custom_call.1} parent=1 // pred_region
      %39 = dma.done [#allocation5], 16
    $region21: #{tpu_custom_call.1} parent=1 // pred_fallthru
      _
    // Predicated region
    $region22: #{tpu_custom_call.1} parent=1 // pred_check
      _
    $region23: #{tpu_custom_call.1} parent=1 // pred_check_branch
      %41 = sbr.rel (0) target = $region25
    $region24: #{tpu_custom_call.1} parent=1 // pred_region
      %43 = dma.done [#allocation3], 256
    $region25: #{tpu_custom_call.1} parent=1 // pred_fallthru
      _
    %44 = sfence
    %p45 = scmp.eq.s32.totalorder 0, 0
    // Predicated region
    $region26: #{tpu_custom_call.1} parent=1 // pred_check
      %p46 = pneg %p45
    $region27: #{tpu_custom_call.1} parent=1 // pred_check_branch
      %48 = sbr.rel (%p46) target = $region29
    $region28: #{tpu_custom_call.1} parent=1 // pred_region
      %s49 = scalar_lea.smem [#allocation7], 0
      %50 = sst [smem:[%s49]] 0.0
      %s51 = scalar_lea.smem [#allocation7], 1
      %52 = sst [smem:[%s51]] 0.0
      %s53 = scalar_lea.smem [#allocation7], 2
      %54 = sst [smem:[%s53]] 0.0
      %s55 = scalar_lea.smem [#allocation7], 3
      %56 = sst [smem:[%s55]] 0.0
      %s57 = scalar_lea.smem [#allocation7], 4
      %58 = sst [smem:[%s57]] 0.0
      %s59 = scalar_lea.smem [#allocation7], 5
      %60 = sst [smem:[%s59]] 0.0
      %s61 = scalar_lea.smem [#allocation7], 6
      %62 = sst [smem:[%s61]] 0.0
      %s63 = scalar_lea.smem [#allocation7], 7
      %64 = sst [smem:[%s63]] 0.0
    $region29: #{tpu_custom_call.1} parent=1 // pred_fallthru
      _
    %v65 = vld [vmem:[%s2] sm:$0xff]
    %v66 = vld [vmem:[%s2 + $0x8] sm:$0xff]
    %v67 = vld [vmem:[#allocation6] sm:$0xff]
    %v68 = vld [vmem:[#allocation6 + $0x8] sm:$0xff]
    %v69 = vsub.f32 %v65, %v67
    %v70 = vsub.f32 %v66, %v68
    %v71 = vmul.f32 %v69, %v69
    %v72 = vmul.f32 %v70, %v70
    %vm73 = vcmask 719872
    %v74 = vsel %vm73, %v72, 0.0
    %v75 = vadd.f32 %v71, %v74
    %76 = vadd.xlane.f32.xlu0 %v75
    %v77 = vpop.xlane.xlu0 %76
    %v78 = vrot.slane %v77, 4
    %v79 = vadd.f32 %v77, %v78
    %v80 = vrot.slane %v79, 2
    %v81 = vadd.f32 %v79, %v80
    %v82 = vrot.slane %v81, 1
    %v83 = vadd.f32 %v81, %v82
    %s84 = vtos %v83
    %v85 = vld [vmem:[%s1] sm:$0xff]
    %v86 = vld [vmem:[%s1 + $0x8] sm:$0xff]
    %v87 = vlog2.pop %v85
    %v88 = vmul.f32 %v87, 0.6931472
    %v89 = vmax.f32 %v88, -100.0
    %v90 = vsub.f32 1.0, %v85
    %v91 = vlog2.pop %v90
    %v92 = vmul.f32 %v91, 0.6931472
    %v93 = vmax.f32 %v92, -100.0
    %v95 = vrot.slane %v89, 6
    %v97 = vmul.f32 %v85, %v95
    %v99 = vrot.slane %v93, 6
    %v101 = vmul.f32 %v90, %v99
    %v102 = vadd.f32 %v97, %v101
    %v103 = vsub.f32 0.0, %v102
    %v105 = vrot.slane %v103, 2
    %vm107 = vcmask 57344
    %v108 = vsel %vm107, %v105, 0.0
    %109 = vadd.xlane.f32.xlu0 %v108
    %v110 = vpop.xlane.xlu0 %109
    %v111 = vrot.slane %v110, 4
    %v112 = vadd.f32 %v110, %v111
    %v113 = vrot.slane %v112, 2
    %v114 = vadd.f32 %v112, %v113
    %v115 = vrot.slane %v114, 1
    %v116 = vadd.f32 %v114, %v115
    %s117 = vtos %v116
    %v118 = vrot.slane %v103, 3
    %v120 = vsel %vm107, %v118, 0.0
    %121 = vadd.xlane.f32.xlu0 %v120
    %v122 = vpop.xlane.xlu0 %121
    %v123 = vrot.slane %v122, 4
    %v124 = vadd.f32 %v122, %v123
    %v125 = vrot.slane %v124, 2
    %v126 = vadd.f32 %v124, %v125
    %v127 = vrot.slane %v126, 1
    %v128 = vadd.f32 %v126, %v127
    %s129 = vtos %v128
    %v131 = vrot.slane %v86, 6
    %v133 = vmul.f32 %v85, %v131
    %v135 = vrot.slane %v133, 1
    %v137 = vadd.f32 %v133, %v135
    %v138 = vrot.slane %v133, 2
    %v140 = vadd.f32 %v137, %v138
    %v142 = vrot.slane %v85, 6
    %v144 = vmul.f32 %v140, %v142
    %v145 = vand.u32 2147483647, %v144
    %v147 = vrot.slane %v145, 4
    %v149 = vsel %vm107, %v147, 0.0
    %150 = vadd.xlane.f32.xlu0 %v149
    %v151 = vpop.xlane.xlu0 %150
    %v152 = vrot.slane %v151, 4
    %v153 = vadd.f32 %v151, %v152
    %v154 = vrot.slane %v153, 2
    %v155 = vadd.f32 %v153, %v154
    %v156 = vrot.slane %v155, 1
    %v157 = vadd.f32 %v155, %v156
    %s158 = vtos %v157
    %s159 = ssub.f32 0.0, %s158
    %v160 = vmul.f32 %v86, %v131
    %v162 = vrot.slane %v160, 1
    %v164 = vadd.f32 %v133, %v162
    %v165 = vrot.slane %v160, 2
    %v167 = vadd.f32 %v164, %v165
    %v168 = vrot.slane %v85, 4
    %v170 = vmul.f32 %v167, %v168
    %v171 = vand.u32 2147483647, %v170
    %v173 = vrot.slane %v171, 7
    %v175 = vsel %vm107, %v173, 0.0
    %176 = vadd.xlane.f32.xlu0 %v175
    %v177 = vpop.xlane.xlu0 %176
    %v178 = vrot.slane %v177, 4
    %v179 = vadd.f32 %v177, %v178
    %v180 = vrot.slane %v179, 2
    %v181 = vadd.f32 %v179, %v180
    %v182 = vrot.slane %v181, 1
    %v183 = vadd.f32 %v181, %v182
    %s184 = vtos %v183
    %s185 = ssub.f32 0.0, %s184
    %v186 = vrot.slane %v85, 3
    %v188 = vmul.f32 %v85, %v186
    %v189 = vrot.slane %v86, 3
    %v191 = vmul.f32 %v85, %v189
    %v193 = vrot.slane %v191, 1
    %v195 = vadd.f32 %v188, %v193
    %v196 = vrot.slane %v191, 2
    %v198 = vadd.f32 %v195, %v196
    %v199 = vrot.slane %v85, 7
    %v201 = vmul.f32 %v198, %v199
    %v202 = vand.u32 2147483647, %v201
    %v203 = vmul.f32 %v86, %v189
    %v205 = vrot.slane %v203, 1
    %v207 = vadd.f32 %v203, %v205
    %v208 = vrot.slane %v203, 2
    %v210 = vadd.f32 %v207, %v208
    %v211 = vrot.slane %v85, 1
    %v213 = vmul.f32 %v210, %v211
    %v214 = vand.u32 2147483647, %v213
    %v216 = vrot.slane %v214, 6
    %v218 = vsub.f32 %v202, %v216
    %v219 = vmul.f32 %v218, %v218
    %v221 = vrot.slane %v219, 4
    %v223 = vsel %vm107, %v221, 0.0
    %224 = vadd.xlane.f32.xlu0 %v223
    %v225 = vpop.xlane.xlu0 %224
    %v226 = vrot.slane %v225, 4
    %v227 = vadd.f32 %v225, %v226
    %v228 = vrot.slane %v227, 2
    %v229 = vadd.f32 %v227, %v228
    %v230 = vrot.slane %v229, 1
    %v231 = vadd.f32 %v229, %v230
    %s232 = vtos %v231
    %s233 = sld [smem:[#allocation7]]
    %s234 = sadd.f32 %s233, %s84
    %s235 = scalar_lea.smem [#allocation7], 0
    %236 = sst [smem:[%s235]] %s234
    %s237 = sld [smem:[#allocation7 + $0x1]]
    %s238 = sadd.f32 %s237, %s117
    %s239 = scalar_lea.smem [#allocation7], 1
    %240 = sst [smem:[%s239]] %s238
    %s241 = sld [smem:[#allocation7 + $0x2]]
    %s242 = sadd.f32 %s241, %s129
    %s243 = scalar_lea.smem [#allocation7], 2
    %244 = sst [smem:[%s243]] %s242
    %s245 = sld [smem:[#allocation7 + $0x3]]
    %s246 = sadd.f32 %s245, %s159
    %s247 = scalar_lea.smem [#allocation7], 3
    %248 = sst [smem:[%s247]] %s246
    %s249 = sld [smem:[#allocation7 + $0x4]]
    %s250 = sadd.f32 %s249, %s185
    %s251 = scalar_lea.smem [#allocation7], 4
    %252 = sst [smem:[%s251]] %s250
    %s253 = sld [smem:[#allocation7 + $0x5]]
    %s254 = sadd.f32 %s253, %s232
    %s255 = scalar_lea.smem [#allocation7], 5
    %256 = sst [smem:[%s255]] %s254
    // Predicated region
    $region30: #{tpu_custom_call.1} parent=1 // pred_check
      %p257 = pneg %p45
    $region31: #{tpu_custom_call.1} parent=1 // pred_check_branch
      %259 = sbr.rel (%p257) target = $region33
    $region32: #{tpu_custom_call.1} parent=1 // pred_region
      %s260 = sld [smem:[#allocation2]]
      %s261 = sld [smem:[#allocation7]]
      %s262 = smul.f32 %s260, %s261
      %s263 = sld [smem:[#allocation2 + $0x1]]
      %s264 = sld [smem:[#allocation7 + $0x1]]
      %s265 = smul.f32 %s263, %s264
      %s266 = sadd.f32 %s262, %s265
      %s267 = sld [smem:[#allocation2 + $0x2]]
      %s268 = sld [smem:[#allocation7 + $0x2]]
      %s269 = smul.f32 %s267, %s268
      %s270 = sadd.f32 %s266, %s269
      %s271 = sld [smem:[#allocation2 + $0x3]]
      %s272 = sld [smem:[#allocation7 + $0x3]]
      %s273 = smul.f32 %s271, %s272
      %s274 = sadd.f32 %s270, %s273
      %s275 = sld [smem:[#allocation2 + $0x4]]
      %s276 = sld [smem:[#allocation7 + $0x4]]
      %s277 = smul.f32 %s275, %s276
      %s278 = sadd.f32 %s274, %s277
      %s279 = sld [smem:[#allocation2 + $0x5]]
      %s280 = sld [smem:[#allocation7 + $0x5]]
      %s281 = smul.f32 %s279, %s280
      %s282 = sadd.f32 %s278, %s281
      %s283 = scalar_lea.smem [#allocation7], 6
      %284 = sst [smem:[%s283]] %s282
    $region33: #{tpu_custom_call.1} parent=1 // pred_fallthru
      _
    // Predicated region
    $region34: #{tpu_custom_call.1} parent=1 // pred_check
      _
    $region35: #{tpu_custom_call.1} parent=1 // pred_check_branch
      %286 = sbr.rel (0) target = $region37
    $region36: #{tpu_custom_call.1} parent=1 // pred_region
      %288 = vsyncadd [#allocation4], 0
      %s290 = sshll.u32 %s4, 4
      %s291 = int_to_ptr.hbm [resolvable:$true] %s290
      %293 = dma.smem_to_hbm [#allocation7], 16, %s291, [#allocation4]
    $region37: #{tpu_custom_call.1} parent=1 // pred_fallthru
      _
    // Predicated region
    $region38: #{tpu_custom_call.1} parent=1 // pred_check
      _
    $region39: #{tpu_custom_call.1} parent=1 // pred_check_branch
      %295 = sbr.rel (0) target = $region41
    $region40: #{tpu_custom_call.1} parent=1 // pred_region
      %297 = dma.done [#allocation4], 16
    $region41: #{tpu_custom_call.1} parent=1 // pred_fallthru
      _
    %298 = sfence
    %299 = vsyncpa [#allocation3], 1
    %300 = vsyncpa [#allocation4], 1
    %301 = vsyncpa [#allocation5], 1

</llo_original>
